<compile_context>
chip_gen: v5e
topology: v5e:2x2
jax: 0.10.0
libtpu: 0.0.40
codegen_flags: <defaults>
</compile_context>

<pallas_src>
import jax
import jax.numpy as jnp
from jax.experimental import pallas as pl
from jax.experimental.pallas import tpu as pltpu


# ---------------------------------------------------------------- helpers ----
def _round_up(a: int, b: int) -> int:
    return (a + b - 1) // b * b


_MAX_LANE_COLS = 1024   # 8 vregs wide: lane-dense, unmasked stores
_MAX_TILE_ROWS = 512    # 512 x 1024 f32 tile = 2 MiB -> safe on every TPU gen


def _vmem_limit(*tile_bytes):
    # 2 pipeline buffers per operand + generous headroom, capped well below
    # physical VMEM on all generations.
    return int(min(64 << 20, 2 * sum(tile_bytes) + (4 << 20)))


# ---------------------------------------------------------------- kernels ----
def _tf_normalize_kernel(x_ref, o_ref):
    # tensorflow mode: [0, 1] -> [-1, 1]
    o_ref[...] = x_ref[...] * 2.0 - 1.0


def _torch_normalize_kernel(x_ref, scale_ref, bias_ref, o_ref):
    # torch mode folded to a per-row FMA:
    #   (x - mean) / std  ==  x * (1/std) + (-mean/std)
    # scale_ref / bias_ref are (tile_rows, 1) f32 and broadcast over the lanes.
    xf = x_ref[...].astype(jnp.float32)
    o_ref[...] = (xf * scale_ref[...] + bias_ref[...]).astype(o_ref.dtype)


# --------------------------------------------------------------- wrappers ----
def _tf_normalize(x):
    orig_shape = x.shape
    total = x.size
    cols = _MAX_LANE_COLS if total >= _MAX_LANE_COLS else _round_up(total, 128)
    rows = pl.cdiv(total, cols)
    tile_rows = min(_MAX_TILE_ROWS, _round_up(rows, 8))
    rows_padded = _round_up(rows, tile_rows)

    flat = jnp.ravel(x)
    flat = jnp.pad(flat, (0, rows_padded * cols - total))
    x2d = flat.reshape(rows_padded, cols)

    tile_bytes = tile_rows * cols * x.dtype.itemsize
    # NOTE: if the caller can donate `x`, input_output_aliases={0: 0} would
    # halve HBM traffic for this purely bandwidth-bound op.
    out2d = pl.pallas_call(
        _tf_normalize_kernel,
        grid=(rows_padded // tile_rows,),
        in_specs=[pl.BlockSpec((tile_rows, cols), lambda i: (i, 0))],
        out_specs=pl.BlockSpec((tile_rows, cols), lambda i: (i, 0)),
        out_shape=jax.ShapeDtypeStruct((rows_padded, cols), x.dtype),
        compiler_params=pltpu.CompilerParams(
            dimension_semantics=("parallel",),
            vmem_limit_bytes=_vmem_limit(tile_bytes, tile_bytes),
        ),
    )(x2d)
    return out2d.reshape(-1)[:total].reshape(orig_shape)


def _torch_normalize(x, mean, std):
    n, c, h, w = x.shape
    rows = n * c
    cols_raw = h * w

    tile_cols = min(_MAX_LANE_COLS, _round_up(cols_raw, 128))
    cols_padded = _round_up(cols_raw, tile_cols)
    tile_rows = min(_MAX_TILE_ROWS, _round_up(rows, 8))
    rows_padded = _round_up(rows, tile_rows)

    # Lane-dense 2D view: one row per (n, c) pair, H*W on the lane axis.
    x2d = x.reshape(rows, cols_raw)
    x2d = jnp.pad(x2d, ((0, rows_padded - rows), (0, cols_padded - cols_raw)))

    # Fold (x - mean) / std into x * scale + bias with f32 params.
    # broadcast_to handles both scalar and per-channel mean/std.
    mean_c = jnp.broadcast_to(jnp.asarray(mean, jnp.float32).reshape(-1), (c,))
    std_c = jnp.broadcast_to(jnp.asarray(std, jnp.float32).reshape(-1), (c,))
    scale_c = 1.0 / std_c
    bias_c = -mean_c * scale_c
    scale_rows = jnp.pad(jnp.tile(scale_c, n), (0, rows_padded - rows),
                         constant_values=1.0).reshape(rows_padded, 1)
    bias_rows = jnp.pad(jnp.tile(bias_c, n), (0, rows_padded - rows),
                        constant_values=0.0).reshape(rows_padded, 1)

    x_tile_bytes = tile_rows * tile_cols * x.dtype.itemsize
    p_tile_bytes = tile_rows * 4

    out2d = pl.pallas_call(
        _torch_normalize_kernel,
        grid=(rows_padded // tile_rows, cols_padded // tile_cols),
        in_specs=[
            pl.BlockSpec((tile_rows, tile_cols), lambda i, j: (i, j)),
            pl.BlockSpec((tile_rows, 1), lambda i, j: (i, 0)),
            pl.BlockSpec((tile_rows, 1), lambda i, j: (i, 0)),
        ],
        out_specs=pl.BlockSpec((tile_rows, tile_cols), lambda i, j: (i, j)),
        out_shape=jax.ShapeDtypeStruct((rows_padded, cols_padded), x.dtype),
        compiler_params=pltpu.CompilerParams(
            dimension_semantics=("parallel", "parallel"),
            vmem_limit_bytes=_vmem_limit(
                x_tile_bytes, x_tile_bytes, p_tile_bytes, p_tile_bytes),
        ),
    )(x2d, scale_rows, bias_rows)

    return out2d[:rows, :cols_raw].reshape(n, c, h, w)


class TfNormalize:
    """JAX/Pallas re-implementation of transferattack.utils.TfNormalize."""

    def __init__(self, mean=0, std=1, mode="tensorflow"):
        self.mean = mean
        self.std = std
        self.mode = mode

    def __call__(self, x):
        # NOTE: for tensors below ~1 MiB a plain fused XLA expression beats any
        # Pallas launch; kept unconditionally on the Pallas path here so the
        # kernel is what gets exercised and tested.
        if self.mode == "tensorflow":
            return _tf_normalize(x)
        elif self.mode == "torch":
            return _torch_normalize(x, self.mean, self.std)
        else:
            raise ValueError(f"unknown mode {self.mode!r}")


# ------------------------------------------------------------------- main ----
if __name__ == "__main__":
    key = jax.random.PRNGKey(0)
    x = jax.random.uniform(key, (2, 4, 16, 16), dtype=jnp.float32)  # NCHW, [0,1]

    # --- tensorflow mode (module default) ---
    y_tf = jax.block_until_ready(TfNormalize(mode="tensorflow")(x))
    ref_tf = x * 2.0 - 1.0
    assert y_tf.shape == x.shape and y_tf.dtype == x.dtype
    assert jnp.allclose(y_tf, ref_tf, atol=1e-6), "tensorflow-mode mismatch"

    # --- tensorflow mode, ragged total size (exercises padding / slicing) ---
    x_odd = jax.random.uniform(jax.random.PRNGKey(1), (2, 3, 17, 19), jnp.float32)
    y_odd = jax.block_until_ready(TfNormalize(mode="tensorflow")(x_odd))
    assert jnp.allclose(y_odd, x_odd * 2.0 - 1.0, atol=1e-6), "tf ragged mismatch"

    # --- torch mode (per-channel mean/std) ---
    mean4 = [0.485, 0.456, 0.406, 0.5]
    std4 = [0.229, 0.224, 0.225, 0.25]
    y_pt = jax.block_until_ready(TfNormalize(mean4, std4, mode="torch")(x))
    ref_pt = (x - jnp.asarray(mean4, jnp.float32).reshape(1, 4, 1, 1)) \
        / jnp.asarray(std4, jnp.float32).reshape(1, 4, 1, 1)
    assert jnp.allclose(y_pt, ref_pt, atol=1e-5), "torch-mode mismatch"

    # --- torch mode, multi-tile grid along the lane axis ---
    x_big = jax.random.uniform(jax.random.PRNGKey(2), (2, 3, 64, 64), jnp.float32)
    mean3 = [0.485, 0.456, 0.406]
    std3 = [0.229, 0.224, 0.225]
    y_big = jax.block_until_ready(TfNormalize(mean3, std3, mode="torch")(x_big))
    ref_big = (x_big - jnp.asarray(mean3, jnp.float32).reshape(1, 3, 1, 1)) \
        / jnp.asarray(std3, jnp.float32).reshape(1, 3, 1, 1)
    assert jnp.allclose(y_big, ref_big, atol=1e-5), "torch-mode (tiled) mismatch"

    # --- torch mode with scalar mean/std (previously crashed in the wrapper) ---
    y_id = jax.block_until_ready(TfNormalize(0.0, 1.0, mode="torch")(x))
    assert jnp.allclose(y_id, x, atol=1e-6), "torch-mode scalar-param mismatch"

    print("KERNEL_OK")
</pallas_src>

<mosaic_0001>
module attributes {stable_mosaic.version = 11 : i64} {
  func.func @_tf_normalize_kernel(%arg0: i32, %arg1: memref<8x1024xf32, #tpu.memory_space<vmem>>, %arg2: memref<8x1024xf32, #tpu.memory_space<vmem>>) attributes {dimension_semantics = [#tpu.dimension_semantics<parallel>], iteration_bounds = array<i64: 1>, scalar_prefetch = 0 : i64, scratch_operands = 0 : i64, tpu.core_type = #tpu.core_type<tc>, window_params = [{transform_indices = @transform_0, window_bounds = array<i64: 8, 1024>}, {transform_indices = @transform_1, window_bounds = array<i64: 8, 1024>}]} {
    %c0 = arith.constant 0 : index
    %c0_0 = arith.constant 0 : index
    %0 = vector.load %arg1[%c0, %c0_0] : memref<8x1024xf32, #tpu.memory_space<vmem>>, vector<8x1024xf32>
    %cst = arith.constant 2.000000e+00 : f32
    %1 = vector.broadcast %cst : f32 to vector<8x1024xf32>
    %2 = arith.mulf %0, %1 : vector<8x1024xf32>
    %cst_1 = arith.constant 1.000000e+00 : f32
    %3 = vector.broadcast %cst_1 : f32 to vector<8x1024xf32>
    %4 = arith.subf %2, %3 : vector<8x1024xf32>
    %c0_2 = arith.constant 0 : index
    %c0_3 = arith.constant 0 : index
    %5 = vector.load %arg2[%c0_2, %c0_3] : memref<8x1024xf32, #tpu.memory_space<vmem>>, vector<8x1024xf32>
    tpu.vector_store %arg2[%c0_2, %c0_3], %4 {strides = array<i32>} : memref<8x1024xf32, #tpu.memory_space<vmem>>, vector<8x1024xf32>,
    return
  }
  func.func @transform_0(%arg0: i32) -> (i32, i32) {
    %c0_i32 = arith.constant 0 : i32
    %c0_i32_0 = arith.constant 0 : i32
    return %arg0, %c0_i32 : i32, i32
  }
  func.func @transform_1(%arg0: i32) -> (i32, i32) {
    %c0_i32 = arith.constant 0 : i32
    %c0_i32_0 = arith.constant 0 : i32
    return %arg0, %c0_i32 : i32, i32
  }
}

</mosaic_0001>

<llo_original>
// kernel: tpu_custom_call.1
$region0: #{tpu_custom_call.1}
  #allocation0 [shape = 'u32[]', space=smem, size = 0x4, offset = 0x4, fixed_abs, tag = 'smem constant byte address 0x4 - core index']
  #allocation1 [shape = 'u32[72,128]{1,0:T(1,128)}', space=vmem, size = 0x9000, scoped, tag = 'internal scratch']
  %s0 = inlined_call_operand.hbm [shape: f32[8,1024], index: 0, kind: input, shape index: {}]
  %s1 = inlined_call_operand.hbm [shape: f32[8,1024], index: 1, kind: output, shape index: {}]
  %s2 = sld [smem:[#allocation0]]
  $region18: #{tpu_custom_call.1} parent=0
    _
  %s4 = ssub.s32 1, %s2
  %s5 = scalar_select 0, %s4, %s2
  $region1: #{tpu_custom_call.1} parent=0
    #allocation2 [shape = 'u8[32768]{0}', space=vmem, size = 0x8000, scoped, tag = 'input window, operand 0, single buffered']
    #allocation3 [shape = 's32[1]{0}', space=sflag, size = 0x4, scoped, tag = 'scoped memory for tpu_custom_call.1']
    #allocation4 [shape = 's32[1]{0}', space=sflag, size = 0x4, scoped, tag = 'scoped memory for tpu_custom_call.1']
    #allocation5 [shape = 'u8[32768]{0}', space=vmem, size = 0x8000, scoped, tag = 'output window, operand 0, single buffered']
    %6 = vsyncpa [#allocation3], 0
    %7 = vsyncpa [#allocation4], 0
    // Predicated region
    $region2: #{tpu_custom_call.1} parent=1 // pred_check
      _
    $region3: #{tpu_custom_call.1} parent=1 // pred_check_branch
      %9 = sbr.rel (0) target = $region5
    $region4: #{tpu_custom_call.1} parent=1 // pred_region
      %11 = vsyncadd [#allocation3], 0
      %s13 = sshll.u32 %s0, 4
      %s14 = int_to_ptr.hbm [resolvable:$true] %s13
      %s15 = sshll.u32 [#allocation2], 4
      %s16 = int_to_ptr.vmem [resolvable:$true] %s15
      %18 = dma.hbm_to_vmem [thread:$0]  %s14, 1024, %s16, [#allocation3]
    $region5: #{tpu_custom_call.1} parent=1 // pred_fallthru
      _
    // Predicated region
    $region6: #{tpu_custom_call.1} parent=1 // pred_check
      _
    $region7: #{tpu_custom_call.1} parent=1 // pred_check_branch
      %20 = sbr.rel (0) target = $region9
    $region8: #{tpu_custom_call.1} parent=1 // pred_region
      %22 = dma.done [#allocation3], 1024
    $region9: #{tpu_custom_call.1} parent=1 // pred_fallthru
      _
    %v23 = vld [vmem:[#allocation2] sm:$0xff]
    %v24 = vld [vmem:[#allocation2 + $0x8] sm:$0xff]
    %v25 = vld [vmem:[#allocation2 + $0x10] sm:$0xff]
    %v26 = vld [vmem:[#allocation2 + $0x18] sm:$0xff]
    %v27 = vld [vmem:[#allocation2 + $0x20] sm:$0xff]
    %v28 = vld [vmem:[#allocation2 + $0x28] sm:$0xff]
    %v29 = vld [vmem:[#allocation2 + $0x30] sm:$0xff]
    %v30 = vld [vmem:[#allocation2 + $0x38] sm:$0xff]
    %v31 = vmul.f32 %v23, 2.0
    %v32 = vmul.f32 %v24, 2.0
    %v33 = vmul.f32 %v25, 2.0
    %v34 = vmul.f32 %v26, 2.0
    %v35 = vmul.f32 %v27, 2.0
    %v36 = vmul.f32 %v28, 2.0
    %v37 = vmul.f32 %v29, 2.0
    %v38 = vmul.f32 %v30, 2.0
    %v39 = vsub.f32 %v31, 1.0
    %v40 = vsub.f32 %v32, 1.0
    %v41 = vsub.f32 %v33, 1.0
    %v42 = vsub.f32 %v34, 1.0
    %v43 = vsub.f32 %v35, 1.0
    %v44 = vsub.f32 %v36, 1.0
    %v45 = vsub.f32 %v37, 1.0
    %v46 = vsub.f32 %v38, 1.0
    %47 = vst [vmem:[#allocation5] sm:$0xff] %v39
    %48 = vst [vmem:[#allocation5 + $0x8] sm:$0xff] %v40
    %49 = vst [vmem:[#allocation5 + $0x10] sm:$0xff] %v41
    %50 = vst [vmem:[#allocation5 + $0x18] sm:$0xff] %v42
    %51 = vst [vmem:[#allocation5 + $0x20] sm:$0xff] %v43
    %52 = vst [vmem:[#allocation5 + $0x28] sm:$0xff] %v44
    %53 = vst [vmem:[#allocation5 + $0x30] sm:$0xff] %v45
    %54 = vst [vmem:[#allocation5 + $0x38] sm:$0xff] %v46
    // Predicated region
    $region10: #{tpu_custom_call.1} parent=1 // pred_check
      _
    $region11: #{tpu_custom_call.1} parent=1 // pred_check_branch
      %56 = sbr.rel (0) target = $region13
    $region12: #{tpu_custom_call.1} parent=1 // pred_region
      %58 = vsyncadd [#allocation4], 0
      %s60 = sshll.u32 [#allocation5], 4
      %s61 = int_to_ptr.vmem [resolvable:$true] %s60
      %s62 = sshll.u32 %s1, 4
      %s63 = int_to_ptr.hbm [resolvable:$true] %s62
      %65 = dma.vmem_to_hbm [thread:$0]  %s61, 1024, %s63, [#allocation4]
    $region13: #{tpu_custom_call.1} parent=1 // pred_fallthru
      _
    // Predicated region
    $region14: #{tpu_custom_call.1} parent=1 // pred_check
      _
    $region15: #{tpu_custom_call.1} parent=1 // pred_check_branch
      %67 = sbr.rel (0) target = $region17
    $region16: #{tpu_custom_call.1} parent=1 // pred_region
      %69 = dma.done [#allocation4], 1024
    $region17: #{tpu_custom_call.1} parent=1 // pred_fallthru
      _
    %70 = vsyncpa [#allocation3], 1
    %71 = vsyncpa [#allocation4], 1

</llo_original>
